<compile_context>
chip_gen: v7x
topology: tpu7x:2x2x1
jax: 0.10.0
libtpu: 0.0.40
codegen_flags: <defaults>
</compile_context>

<pallas_src>
import functools

import jax
import jax.numpy as jnp
from jax.experimental import pallas as pl
from jax.experimental.pallas import tpu as pltpu

LANE = 128
SUBLANE = 8


def _round_up(a, m):
    return ((a + m - 1) // m) * m


def _device_kind():
    try:
        return jax.devices()[0].device_kind.lower()
    except Exception:
        return ""


def _mse_kernel(pred_ref, real_ref, out_ref, acc_ref, *,
                row_tile, blocks_per_split, total_rows, total_blocks,
                need_mask):
    s = pl.program_id(0)   # split axis ("parallel" -> both TCs on v7x)
    j = pl.program_id(1)   # sequential reduction axis within a split

    @pl.when(j == 0)
    def _():
        acc_ref[...] = jnp.zeros_like(acc_ref)

    d = real_ref[...].astype(jnp.float32) - pred_ref[...].astype(jnp.float32)
    sq = d * d

    folds = row_tile // SUBLANE

    def _fold(x):
        # (row_tile, 128) -> (8, 128): folds-1 pure VPU vreg adds, no XLU.
        if folds == 1:
            return x
        return x.reshape(folds, SUBLANE, LANE).sum(axis=0)

    if need_mask:
        blk = s * blocks_per_split + j          # un-clamped logical block id
        last_blk = total_blocks - 1

        # Common path: full interior block, no masking cost.
        @pl.when(blk < last_blk)
        def _():
            acc_ref[...] += _fold(sq)

        # Edge path: ragged last block, or a fully-padded grid step that
        # re-reads the last block through the clamped index_map -> zeroed.
        @pl.when(blk >= last_blk)
        def _():
            row0 = blk * row_tile
            row_ids = row0 + jax.lax.broadcasted_iota(
                jnp.int32, (row_tile, LANE), 0)
            acc_ref[...] += _fold(jnp.where(row_ids < total_rows, sq, 0.0))
    else:
        acc_ref[...] += _fold(sq)

    @pl.when(j == pl.num_programs(1) - 1)
    def _():
        out_ref[...] = acc_ref[...]


def mse(pred, real, *, row_tile=None, num_splits=None):
    """Pallas implementation of MSE.forward(pred, real) = sum((real-pred)^2)/n."""
    assert pred.shape == real.shape, "pred/real must match"
    n = pred.size  # torch.numel
    if n == 0:
        return jnp.float32(0.0)

    kind = _device_kind()
    if row_tile is None:
        # v7x: 3.2 TB/s HBM -> bigger blocks to amortize per-step overhead.
        row_tile = 4096 if "v7" in kind else 2048
    if num_splits is None:
        # Only v7x has 2 TensorCores per chip; 1-TC chips skip the split.
        num_splits = 2 if "v7" in kind else 1
    # TODO(synk): verify "parallel" actually shards axis 0 across both v7x TCs;
    # if not, switch to pltpu.CORE_PARALLEL / pl.core_map.

    flat_p = jnp.ravel(pred)                 # free reshape, no dtype cast
    flat_r = jnp.ravel(real)

    rem = n % LANE
    rows = n // LANE

    # <=127-element ragged tail: tiny wrapper-side sum, no O(n) pad/copy.
    if rem:
        tp = flat_p[rows * LANE:].astype(jnp.float32)
        tr = flat_r[rows * LANE:].astype(jnp.float32)
        tail_sum = jnp.sum((tr - tp) * (tr - tp))
    else:
        tail_sum = jnp.float32(0.0)

    if rows == 0:
        return tail_sum / jnp.float32(n)

    if rem:
        flat_p = flat_p[: rows * LANE]
        flat_r = flat_r[: rows * LANE]

    p2d = flat_p.reshape(rows, LANE)
    r2d = flat_r.reshape(rows, LANE)

    # Round the row tile to the dtype's packed sublane tile.
    p_item = jnp.dtype(pred.dtype).itemsize
    r_item = jnp.dtype(real.dtype).itemsize
    sub_tile = {4: 8, 2: 16, 1: 32}.get(min(p_item, r_item), SUBLANE)
    sub_tile = max(sub_tile, SUBLANE)
    if rows <= row_tile:
        row_tile = _round_up(rows, sub_tile)
    else:
        row_tile = max(sub_tile, (row_tile // sub_tile) * sub_tile)

    total_blocks = pl.cdiv(rows, row_tile)
    num_splits = max(1, min(num_splits, total_blocks))
    blocks_per_split = pl.cdiv(total_blocks, num_splits)

    ragged_rows = (rows % row_tile) != 0
    padded_grid = (num_splits * blocks_per_split) != total_blocks
    need_mask = ragged_rows or padded_grid

    def in_index_map(s, j):
        idx = s * blocks_per_split + j
        if need_mask:
            idx = jnp.minimum(idx, total_blocks - 1)
        return (idx, 0)

    kernel = functools.partial(
        _mse_kernel,
        row_tile=row_tile,
        blocks_per_split=blocks_per_split,
        total_rows=rows,
        total_blocks=total_blocks,
        need_mask=need_mask,
    )

    partials = pl.pallas_call(
        kernel,
        out_shape=jax.ShapeDtypeStruct((num_splits * SUBLANE, LANE), jnp.float32),
        grid_spec=pltpu.PrefetchScalarGridSpec(
            num_scalar_prefetch=0,
            grid=(num_splits, blocks_per_split),
            in_specs=[
                pl.BlockSpec((row_tile, LANE), in_index_map),
                pl.BlockSpec((row_tile, LANE), in_index_map),
            ],
            out_specs=pl.BlockSpec((SUBLANE, LANE), lambda s, j: (s, 0)),
            scratch_shapes=[pltpu.VMEM((SUBLANE, LANE), jnp.float32)],
        ),
        compiler_params=pltpu.CompilerParams(
            dimension_semantics=("parallel", "arbitrary"),
        ),
        cost_estimate=pl.CostEstimate(
            flops=3 * n, transcendentals=0,
            bytes_accessed=n * (p_item + r_item)),
    )(p2d, r2d)

    # Tiny final combine (num_splits * 8 * 128 f32 values) + ragged tail.
    return (jnp.sum(partials) + tail_sum) / jnp.float32(n)


def mse_ref(pred, real):
    d = real.astype(jnp.float32) - pred.astype(jnp.float32)
    return jnp.sum(d * d) / d.size


if __name__ == "__main__":
    key = jax.random.PRNGKey(0)
    k1, k2 = jax.random.split(key)

    # Primary test: small NCHW feature maps (batch=2, channels=4, 16x16).
    shape = (2, 4, 16, 16)
    pred = jax.random.normal(k1, shape, dtype=jnp.float32)
    real = jax.random.normal(k2, shape, dtype=jnp.float32)
    out = jax.block_until_ready(mse(pred, real))
    ref = mse_ref(pred, real)
    assert jnp.allclose(out, ref, rtol=1e-5, atol=1e-6), (out, ref)

    # Ragged size: exercises multi-block grid, masked edge block, padded split
    # steps, and the wrapper-side <128-element tail (2600 = 20*128 + 40).
    k3, k4 = jax.random.split(k2)
    pred2 = jax.random.normal(k3, (2600,), dtype=jnp.float32)
    real2 = jax.random.normal(k4, (2600,), dtype=jnp.float32)
    out2 = jax.block_until_ready(mse(pred2, real2, row_tile=8, num_splits=2))
    ref2 = mse_ref(pred2, real2)
    assert jnp.allclose(out2, ref2, rtol=1e-5, atol=1e-6), (out2, ref2)

    # bf16 path: packed sublane-tile rounding (16) + masked overhang block.
    k5, k6 = jax.random.split(k4)
    pred3 = jax.random.normal(k5, (40, 128), dtype=jnp.bfloat16)
    real3 = jax.random.normal(k6, (40, 128), dtype=jnp.bfloat16)
    out3 = jax.block_until_ready(mse(pred3, real3))
    ref3 = mse_ref(pred3, real3)
    assert jnp.allclose(out3, ref3, rtol=1e-5, atol=1e-6), (out3, ref3)

    print("KERNEL_OK")
</pallas_src>

<mosaic_0001>
module attributes {stable_mosaic.version = 11 : i64} {
  func.func @_mse_kernel(%arg0: i32, %arg1: i32, %arg2: memref<16x128xf32, #tpu.memory_space<vmem>>, %arg3: memref<16x128xf32, #tpu.memory_space<vmem>>, %arg4: memref<8x128xf32, #tpu.memory_space<vmem>>, %arg5: memref<8x128xf32, #tpu.memory_space<vmem>>) attributes {dimension_semantics = [#tpu.dimension_semantics<parallel>, #tpu.dimension_semantics<arbitrary>], iteration_bounds = array<i64: 1, 1>, scalar_prefetch = 0 : i64, scratch_operands = 1 : i64, tpu.core_type = #tpu.core_type<tc>, window_params = [{transform_indices = @transform_0, window_bounds = array<i64: 16, 128>}, {transform_indices = @transform_1, window_bounds = array<i64: 16, 128>}, {transform_indices = @transform_2, window_bounds = array<i64: 8, 128>}]} {
    %c0_i32 = arith.constant 0 : i32
    %0 = arith.cmpi eq, %arg1, %c0_i32 : i32
    %1 = arith.extui %0 : i1 to i32
    %c0_i32_0 = arith.constant 0 : i32
    %2 = arith.cmpi ne, %1, %c0_i32_0 : i32
    scf.if %2 {
      %cst_10 = arith.constant 0.000000e+00 : f32
      %15 = vector.broadcast %cst_10 : f32 to vector<8x128xf32>
      %c0_11 = arith.constant 0 : index
      %c0_12 = arith.constant 0 : index
      %16 = vector.load %arg5[%c0_11, %c0_12] : memref<8x128xf32, #tpu.memory_space<vmem>>, vector<8x128xf32>
      tpu.vector_store %arg5[%c0_11, %c0_12], %15 {strides = array<i32>} : memref<8x128xf32, #tpu.memory_space<vmem>>, vector<8x128xf32>,
    } else {
    }
    %c0 = arith.constant 0 : index
    %c0_1 = arith.constant 0 : index
    %3 = vector.load %arg3[%c0, %c0_1] : memref<16x128xf32, #tpu.memory_space<vmem>>, vector<16x128xf32>
    %c0_2 = arith.constant 0 : index
    %c0_3 = arith.constant 0 : index
    %4 = vector.load %arg2[%c0_2, %c0_3] : memref<16x128xf32, #tpu.memory_space<vmem>>, vector<16x128xf32>
    %5 = arith.subf %3, %4 : vector<16x128xf32>
    %6 = arith.mulf %5, %5 : vector<16x128xf32>
    %c0_4 = arith.constant 0 : index
    %c0_5 = arith.constant 0 : index
    %7 = vector.load %arg5[%c0_4, %c0_5] : memref<8x128xf32, #tpu.memory_space<vmem>>, vector<8x128xf32>
    %8 = vector.shape_cast %6 : vector<16x128xf32> to vector<2x8x128xf32>
    %cst = arith.constant dense<0.000000e+00> : vector<8x128xf32>
    %9 = vector.multi_reduction <add>, %8, %cst [0] : vector<2x8x128xf32> to vector<8x128xf32>
    %10 = arith.addf %7, %9 : vector<8x128xf32>
    %c0_6 = arith.constant 0 : index
    %c0_7 = arith.constant 0 : index
    %11 = vector.load %arg5[%c0_6, %c0_7] : memref<8x128xf32, #tpu.memory_space<vmem>>, vector<8x128xf32>
    tpu.vector_store %arg5[%c0_6, %c0_7], %10 {strides = array<i32>} : memref<8x128xf32, #tpu.memory_space<vmem>>, vector<8x128xf32>,
    %c0_i32_8 = arith.constant 0 : i32
    %12 = arith.cmpi eq, %arg1, %c0_i32_8 : i32
    %13 = arith.extui %12 : i1 to i32
    %c0_i32_9 = arith.constant 0 : i32
    %14 = arith.cmpi ne, %13, %c0_i32_9 : i32
    scf.if %14 {
      %c0_10 = arith.constant 0 : index
      %c0_11 = arith.constant 0 : index
      %15 = vector.load %arg5[%c0_10, %c0_11] : memref<8x128xf32, #tpu.memory_space<vmem>>, vector<8x128xf32>
      %c0_12 = arith.constant 0 : index
      %c0_13 = arith.constant 0 : index
      %16 = vector.load %arg4[%c0_12, %c0_13] : memref<8x128xf32, #tpu.memory_space<vmem>>, vector<8x128xf32>
      tpu.vector_store %arg4[%c0_12, %c0_13], %15 {strides = array<i32>} : memref<8x128xf32, #tpu.memory_space<vmem>>, vector<8x128xf32>,
    } else {
    }
    return
  }
  func.func @transform_0(%arg0: i32, %arg1: i32) -> (i32, i32) {
    %c1_i32 = arith.constant 1 : i32
    %0 = arith.muli %arg0, %c1_i32 : i32
    %1 = arith.addi %0, %arg1 : i32
    %c0_i32 = arith.constant 0 : i32
    %c0_i32_0 = arith.constant 0 : i32
    return %1, %c0_i32 : i32, i32
  }
  func.func @transform_1(%arg0: i32, %arg1: i32) -> (i32, i32) {
    %c1_i32 = arith.constant 1 : i32
    %0 = arith.muli %arg0, %c1_i32 : i32
    %1 = arith.addi %0, %arg1 : i32
    %c0_i32 = arith.constant 0 : i32
    %c0_i32_0 = arith.constant 0 : i32
    return %1, %c0_i32 : i32, i32
  }
  func.func @transform_2(%arg0: i32, %arg1: i32) -> (i32, i32) {
    %c0_i32 = arith.constant 0 : i32
    %c0_i32_0 = arith.constant 0 : i32
    return %arg0, %c0_i32 : i32, i32
  }
}

</mosaic_0001>

<llo_original>
// kernel: tpu_custom_call.1
$region0: #{tpu_custom_call.1}
  #allocation0 [shape = 'u32[]', space=smem, size = 0x4, offset = 0x4, fixed_abs, tag = 'smem constant byte address 0x4 - core index']
  #allocation1 [shape = 'u32[144,128]{1,0:T(1,128)}', space=vmem, size = 0x12000, scoped, tag = 'internal scratch']
  #allocation2 [shape = 'f32[8,128]{1,0:T(8,128)}', space=vmem, size = 0x1000, scoped, tag = 'scratch operand']
  %s0 = inlined_call_operand.hbm [shape: f32[16,128], index: 0, kind: input, shape index: {}]
  %s1 = inlined_call_operand.hbm [shape: f32[16,128], index: 1, kind: input, shape index: {}]
  %s2 = inlined_call_operand.hbm [shape: f32[8,128], index: 2, kind: output, shape index: {}]
  %s3 = sld [smem:[#allocation0]]
  $region34: #{tpu_custom_call.1} parent=0
    _
  %s5 = ssub.s32 1, %s3
  %s6 = scalar_select 0, %s5, %s3
  $region1: #{tpu_custom_call.1} parent=0
    #allocation3 [shape = 'u8[8192]{0}', space=vmem, size = 0x2000, scoped, tag = 'input window, operand 0, single buffered']
    #allocation4 [shape = 's32[1]{0}', space=sflag, size = 0x4, scoped, tag = 'scoped memory for tpu_custom_call.1']
    #allocation5 [shape = 's32[1]{0}', space=sflag, size = 0x4, scoped, tag = 'scoped memory for tpu_custom_call.1']
    #allocation6 [shape = 'u8[8192]{0}', space=vmem, size = 0x2000, scoped, tag = 'input window, operand 1, single buffered']
    #allocation7 [shape = 's32[1]{0}', space=sflag, size = 0x4, scoped, tag = 'scoped memory for tpu_custom_call.1']
    #allocation8 [shape = 'u8[4096]{0}', space=vmem, size = 0x1000, scoped, tag = 'output window, operand 0, single buffered']
    %7 = vsyncpa [#allocation4], 0
    %8 = vsyncpa [#allocation7], 0
    %9 = vsyncpa [#allocation5], 0
    // Predicated region
    $region2: #{tpu_custom_call.1} parent=1 // pred_check
      _
    $region3: #{tpu_custom_call.1} parent=1 // pred_check_branch
      %11 = sbr.rel (0) target = $region5
    $region4: #{tpu_custom_call.1} parent=1 // pred_region
      %s12 = sadd.s32 0, 0
      %s13 = smul.u32 2, %s12
      %s15 = ssub.s32 256, 256
      %16 = vsyncadd [#allocation4], %s15
      %s17 = smul.addr %s13, 128
      %s18 = scalar_lea.hbm %s0, %s17
      %s19 = sshll.u32 [#allocation3], 4
      %s20 = int_to_ptr.vmem [resolvable:$true] %s19
      %25 = dma.hbm_to_vmem [thread:$0]  %s18, 256, %s20, [#allocation4], 128, 128, 8
    $region5: #{tpu_custom_call.1} parent=1 // pred_fallthru
      _
    // Predicated region
    $region6: #{tpu_custom_call.1} parent=1 // pred_check
      _
    $region7: #{tpu_custom_call.1} parent=1 // pred_check_branch
      %27 = sbr.rel (0) target = $region9
    $region8: #{tpu_custom_call.1} parent=1 // pred_region
      %s28 = sadd.s32 0, 0
      %s29 = smul.u32 2, %s28
      %s31 = ssub.s32 256, 256
      %32 = vsyncadd [#allocation7], %s31
      %s33 = smul.addr %s29, 128
      %s34 = scalar_lea.hbm %s1, %s33
      %s35 = sshll.u32 [#allocation6], 4
      %s36 = int_to_ptr.vmem [resolvable:$true] %s35
      %41 = dma.hbm_to_vmem [thread:$0]  %s34, 256, %s36, [#allocation7], 128, 128, 8
    $region9: #{tpu_custom_call.1} parent=1 // pred_fallthru
      _
    // Predicated region
    $region10: #{tpu_custom_call.1} parent=1 // pred_check
      _
    $region11: #{tpu_custom_call.1} parent=1 // pred_check_branch
      %43 = sbr.rel (0) target = $region13
    $region12: #{tpu_custom_call.1} parent=1 // pred_region
      %44 = dma.done [#allocation4], 256
    $region13: #{tpu_custom_call.1} parent=1 // pred_fallthru
      _
    // Predicated region
    $region14: #{tpu_custom_call.1} parent=1 // pred_check
      _
    $region15: #{tpu_custom_call.1} parent=1 // pred_check_branch
      %46 = sbr.rel (0) target = $region17
    $region16: #{tpu_custom_call.1} parent=1 // pred_region
      %47 = dma.done [#allocation7], 256
    $region17: #{tpu_custom_call.1} parent=1 // pred_fallthru
      _
    %s48 = sadd.s32 0, 0
    %s49 = smul.u32 2, %s48
    %s50 = sadd.s32 0, 0
    %s51 = smul.u32 2, %s50
    %p52 = scmp.eq.s32.totalorder 0, 0
    // Predicated region
    $region18: #{tpu_custom_call.1} parent=1 // pred_check
      %p53 = pneg %p52
    $region19: #{tpu_custom_call.1} parent=1 // pred_check_branch
      %55 = sbr.rel (%p53) target = $region21
    $region20: #{tpu_custom_call.1} parent=1 // pred_region
      %56 = vst [vmem:[#allocation2] sm:$0xff] 0.0
    $region21: #{tpu_custom_call.1} parent=1 // pred_fallthru
      _
    %v57 = vld [vmem:[#allocation6] sm:$0xff]
    %v58 = vld [vmem:[#allocation6 + $0x8] sm:$0xff]
    %v59 = vld [vmem:[#allocation3] sm:$0xff]
    %v60 = vld [vmem:[#allocation3 + $0x8] sm:$0xff]
    %v61 = vsub.f32 %v57, %v59
    %v62 = vsub.f32 %v58, %v60
    %v63 = vmul.f32 %v61, %v61
    %v64 = vmul.f32 %v62, %v62
    %v65 = vld [vmem:[#allocation2] sm:$0xff]
    %v66 = vadd.f32 %v63, %v64
    %v67 = vadd.f32 %v65, %v66
    %68 = vst [vmem:[#allocation2] sm:$0xff] %v67
    // Predicated region
    $region22: #{tpu_custom_call.1} parent=1 // pred_check
      %p69 = pneg %p52
    $region23: #{tpu_custom_call.1} parent=1 // pred_check_branch
      %71 = sbr.rel (%p69) target = $region25
    $region24: #{tpu_custom_call.1} parent=1 // pred_region
      %v72 = vld [vmem:[#allocation2] sm:$0xff]
      %73 = vst [vmem:[#allocation8] sm:$0xff] %v72
    $region25: #{tpu_custom_call.1} parent=1 // pred_fallthru
      _
    // Predicated region
    $region26: #{tpu_custom_call.1} parent=1 // pred_check
      _
    $region27: #{tpu_custom_call.1} parent=1 // pred_check_branch
      %75 = sbr.rel (0) target = $region29
    $region28: #{tpu_custom_call.1} parent=1 // pred_region
      %s77 = ssub.s32 128, 128
      %78 = vsyncadd [#allocation5], %s77
      %s80 = sshll.u32 [#allocation8], 4
      %s81 = int_to_ptr.vmem [resolvable:$true] %s80
      %83 = dma.vmem_to_hbm [thread:$0]  %s81, 128, %s2, [#allocation5]
    $region29: #{tpu_custom_call.1} parent=1 // pred_fallthru
      _
    // Predicated region
    $region30: #{tpu_custom_call.1} parent=1 // pred_check
      _
    $region31: #{tpu_custom_call.1} parent=1 // pred_check_branch
      %85 = sbr.rel (0) target = $region33
    $region32: #{tpu_custom_call.1} parent=1 // pred_region
      %86 = dma.done [#allocation5], 128
    $region33: #{tpu_custom_call.1} parent=1 // pred_fallthru
      _
    %87 = vsyncpa [#allocation4], 1
    %88 = vsyncpa [#allocation7], 1
    %89 = vsyncpa [#allocation5], 1

</llo_original>
